<compile_context>
chip_gen: v5e
topology: v5e:2x2
jax: 0.10.0
libtpu: 0.0.40
codegen_flags: <defaults>
</compile_context>

<pallas_src>
import functools

import jax
import jax.numpy as jnp
from jax import lax
from jax.experimental import pallas as pl
from jax.experimental.pallas import tpu as pltpu

_LANE = 128


def _round_up(x, m):
    return ((x + m - 1) // m) * m


def _get_int_attr(obj, names):
    for name in names:
        v = getattr(obj, name, None)
        if v is None:
            continue
        try:
            v = int(v)
        except Exception:
            continue
        if v > 0:
            return v
    return None


@functools.lru_cache(maxsize=1)
def _tpu_info():
    """(tensorcores_per_chip, vmem_capacity_bytes) with safe fallbacks."""
    cores, vmem = 1, 64 * 1024 * 1024          # conservative (v7x physical)
    try:
        info = pltpu.get_tpu_info()
        v = _get_int_attr(info, ("vmem_capacity_bytes", "vmem_bytes",
                                 "vmem_size_bytes"))
        if v:
            vmem = v
        c = _get_int_attr(info, ("num_cores", "num_tensorcores",
                                 "tensorcore_count", "cores_per_chip",
                                 "num_cores_per_chip"))
        if c:
            cores = c
    except Exception:
        pass
    if cores == 1:
        try:
            if "v7" in jax.devices()[0].device_kind.lower():
                cores = 2
        except Exception:
            pass
    return cores, vmem


def _vmem_limit_bytes():
    _, cap = _tpu_info()
    return max(32 * 1024 * 1024, min(int(cap * 0.9), 100 * 1024 * 1024))


def _choose_batch_tiling(batch):
    """Pack batch rows into sublanes.  On 1-TC chips the grid is a serial
    loop, so never split B<=8 into multiple programs; on multi-TC chips keep
    at least `num_tc` programs so every TensorCore gets work."""
    if batch <= 1:
        return 1, 1
    num_tc, _ = _tpu_info()
    if num_tc > 1:
        b_tile = min(8, pl.cdiv(batch, num_tc))
    else:
        b_tile = min(8, batch)
    return b_tile, pl.cdiv(batch, b_tile)


def _shrink_b_tile_for_vmem(b_tile, d, n, npoint_pad, num_outputs, in_buffers):
    """Halve b_tile until the kernel's VMEM footprint fits the budget."""
    _, cap = _tpu_info()
    budget = int(cap * 0.75)

    def footprint(bt):
        inp = in_buffers * d * bt * n * 4
        scratch = 2 * bt * n * 4
        out = 2 * num_outputs * bt * npoint_pad * 4
        return inp + scratch + out

    while b_tile > 1 and footprint(b_tile) > budget:
        b_tile //= 2
    return max(b_tile, 1)


def _pack_batch_planes(x_dbn, b_tile, num_groups):
    """(D, B, N) -> (num_groups, D, b_tile, N), zero-padding the batch."""
    d, b, n = x_dbn.shape
    b_pad = b_tile * num_groups
    if b_pad != b:
        x_dbn = jnp.pad(x_dbn, ((0, 0), (0, b_pad - b), (0, 0)))
    x = x_dbn.reshape(d, num_groups, b_tile, n)
    return jnp.transpose(x, (1, 0, 2, 3))


# ----------------------------------------------------------------------------
# In-kernel FPS selection loop (batch rows packed into sublanes)
# ----------------------------------------------------------------------------
def _run_fps(dist_fn, idx_ref, dist_sc, *, npoint, n, b_tile, carry_dist):
    """Furthest-point-sampling selection loop.

    dist_fn(onehot) -> (b_tile, n) squared distances of every point to the
    last selected point (onehot is its (b_tile, n) lane mask).
    idx_ref  : (1, b_tile, npoint_pad) int32 output block (npoint_pad % 128 == 0).
    dist_sc  : (b_tile, n) f32 VMEM scratch (used only when not carry_dist).
    """
    npoint_pad = idx_ref.shape[-1]
    lane_iota = lax.broadcasted_iota(jnp.int32, (b_tile, n), 1)
    chunk_iota = lax.broadcasted_iota(jnp.int32, (b_tile, _LANE), 1)

    dist0 = jnp.full((b_tile, n), 1e10, dtype=jnp.float32)
    chunk = jnp.zeros((b_tile, _LANE), jnp.int32)        # position 0 <- index 0
    last = jnp.zeros((b_tile, 1), jnp.int32)

    if carry_dist:
        carry = (chunk, last, dist0)
    else:
        dist_sc[...] = dist0
        carry = (chunk, last)

    n_chunks = npoint_pad // _LANE
    for ci in range(n_chunks):                            # static chunk loop
        start = ci * _LANE
        stop = min(npoint, start + _LANE)
        lo = max(1, start)

        def body(s, carry, _start=start):
            if carry_dist:
                chunk, last, dist_prev = carry
            else:
                chunk, last = carry
                dist_prev = dist_sc[...]
            onehot = (lane_iota == last).astype(jnp.float32)
            dist = jnp.minimum(dist_prev, dist_fn(onehot))
            if not carry_dist:
                dist_sc[...] = dist
            # per-row max, then first index achieving it (lowest-index tie-break)
            m = jnp.max(dist, axis=1, keepdims=True)
            cand = jnp.where(dist >= m, lane_iota, jnp.int32(n))
            nxt = jnp.min(cand, axis=1, keepdims=True)
            chunk = jnp.where(chunk_iota == (s - _start), nxt, chunk)
            if carry_dist:
                return chunk, nxt, dist
            return chunk, nxt

        carry = lax.fori_loop(lo, stop, body, carry)
        # One lane-dense, statically-offset 128-wide store per chunk.
        idx_ref[0, :, start:start + _LANE] = carry[0]


def _make_point_dist_fn(planes_ref, num_ch, b_tile, n):
    """Squared euclidean distance to the last selected point (channels 0..2)."""
    def dist_fn(onehot):
        dtot = jnp.zeros((b_tile, n), dtype=jnp.float32)
        for c in range(num_ch):
            plane = planes_ref[0, c]                                     # (bt, n)
            last_c = jnp.sum(plane * onehot, axis=1, keepdims=True)      # (bt, 1)
            diff = plane - last_c
            dtot = dtot + diff * diff
        return dtot
    return dist_fn


def _make_feat_dist_fn(planes_ref, sq_sc, d, b_tile, n):
    """calc_square_dist(norm=False) row of the last selected point, on the fly."""
    def dist_fn(onehot):
        dot = jnp.zeros((b_tile, n), dtype=jnp.float32)
        sq_last = jnp.zeros((b_tile, 1), dtype=jnp.float32)
        for c in range(d):
            plane = planes_ref[0, c]                                     # (bt, n)
            last_c = jnp.sum(plane * onehot, axis=1, keepdims=True)      # (bt, 1)
            dot = dot + plane * last_c
            sq_last = sq_last + last_c * last_c
        # |a_j|^2 + |a_last|^2 - 2 a_j . a_last
        return sq_sc[...] + sq_last - 2.0 * dot
    return dist_fn


# ----------------------------------------------------------------------------
# Pallas kernels
# ----------------------------------------------------------------------------
def _dfps_kernel(pts_ref, idx_ref, dist_sc, *, npoint, n, b_tile, carry_dist):
    """pts_ref: (1, 3, b_tile, n) f32, idx_ref: (1, b_tile, npoint_pad) i32."""
    dist_fn = _make_point_dist_fn(pts_ref, 3, b_tile, n)
    _run_fps(dist_fn, idx_ref, dist_sc,
             npoint=npoint, n=n, b_tile=b_tile, carry_dist=carry_dist)


def _ffps_kernel(feat_ref, idx_ref, sq_sc, dist_sc, *,
                 npoint, n, d, b_tile, carry_dist):
    """feat_ref: (1, d, b_tile, n) f32, idx_ref: (1, b_tile, npoint_pad) i32."""
    sq = jnp.zeros((b_tile, n), dtype=jnp.float32)
    for c in range(d):
        plane = feat_ref[0, c]
        sq = sq + plane * plane
    sq_sc[...] = sq
    dist_fn = _make_feat_dist_fn(feat_ref, sq_sc, d, b_tile, n)
    _run_fps(dist_fn, idx_ref, dist_sc,
             npoint=npoint, n=n, b_tile=b_tile, carry_dist=carry_dist)


def _fs_kernel(feat_ref, idx_f_ref, idx_d_ref, sq_sc, dist_sc, *,
               npoint, n, d, b_tile, carry_dist):
    """Fused FS: F-FPS on all channels + D-FPS on xyz (channels 0..2)."""
    sq = jnp.zeros((b_tile, n), dtype=jnp.float32)
    for c in range(d):
        plane = feat_ref[0, c]
        sq = sq + plane * plane
    sq_sc[...] = sq
    _run_fps(_make_feat_dist_fn(feat_ref, sq_sc, d, b_tile, n),
             idx_f_ref, dist_sc,
             npoint=npoint, n=n, b_tile=b_tile, carry_dist=carry_dist)
    _run_fps(_make_point_dist_fn(feat_ref, 3, b_tile, n),
             idx_d_ref, dist_sc,
             npoint=npoint, n=n, b_tile=b_tile, carry_dist=carry_dist)


# ----------------------------------------------------------------------------
# Wrappers
# ----------------------------------------------------------------------------
def furthest_point_sample(points_xyz, npoint):
    """points_xyz: (B, N, 3) -> (B, npoint) int32 indices (D-FPS)."""
    pts = points_xyz.astype(jnp.float32)
    b, n, _ = pts.shape
    b_tile, groups = _choose_batch_tiling(b)
    planes = _pack_batch_planes(jnp.transpose(pts, (2, 0, 1)), b_tile, groups)
    npoint_pad = _round_up(npoint, _LANE)
    carry_dist = b_tile * n * 4 <= 64 * 1024
    kernel = functools.partial(_dfps_kernel, npoint=npoint, n=n,
                               b_tile=b_tile, carry_dist=carry_dist)
    out = pl.pallas_call(
        kernel,
        out_shape=jax.ShapeDtypeStruct((groups, b_tile, npoint_pad), jnp.int32),
        grid=(groups,),
        in_specs=[pl.BlockSpec((1, 3, b_tile, n), lambda g: (g, 0, 0, 0))],
        out_specs=pl.BlockSpec((1, b_tile, npoint_pad), lambda g: (g, 0, 0)),
        scratch_shapes=[pltpu.VMEM((b_tile, n), jnp.float32)],
        compiler_params=pltpu.CompilerParams(
            dimension_semantics=("parallel",),
            vmem_limit_bytes=_vmem_limit_bytes()),
    )(planes)
    return out.reshape(groups * b_tile, npoint_pad)[:b, :npoint]


def _feature_planes(points_xyz, features):
    """points (B,N,3), features (B,C,N) -> channel planes (3+C, B, N)."""
    pts = jnp.transpose(points_xyz.astype(jnp.float32), (2, 0, 1))    # (3, B, N)
    fts = jnp.transpose(features.astype(jnp.float32), (1, 0, 2))      # (C, B, N)
    return jnp.concatenate([pts, fts], axis=0)


def _feature_fps_call(planes_dbn, npoint, *, with_dfps):
    """planes_dbn: (3+C, B, N).  Returns (B, npoint) F-FPS indices, or a pair
    (ffps_idx, dfps_idx) when with_dfps (fused FS mode)."""
    d, b, n = planes_dbn.shape
    b_tile, groups = _choose_batch_tiling(b)
    npoint_pad = _round_up(npoint, _LANE)
    num_outputs = 2 if with_dfps else 1
    b_tile = _shrink_b_tile_for_vmem(b_tile, d, n, npoint_pad,
                                     num_outputs, in_buffers=1)
    groups = pl.cdiv(b, b_tile)
    planes = _pack_batch_planes(planes_dbn, b_tile, groups)
    carry_dist = b_tile * n * 4 <= 64 * 1024

    if with_dfps:
        kernel = functools.partial(_fs_kernel, npoint=npoint, n=n, d=d,
                                   b_tile=b_tile, carry_dist=carry_dist)
        out_shape = (jax.ShapeDtypeStruct((groups, b_tile, npoint_pad), jnp.int32),
                     jax.ShapeDtypeStruct((groups, b_tile, npoint_pad), jnp.int32))
        out_specs = (pl.BlockSpec((1, b_tile, npoint_pad), lambda g: (g, 0, 0)),
                     pl.BlockSpec((1, b_tile, npoint_pad), lambda g: (g, 0, 0)))
    else:
        kernel = functools.partial(_ffps_kernel, npoint=npoint, n=n, d=d,
                                   b_tile=b_tile, carry_dist=carry_dist)
        out_shape = jax.ShapeDtypeStruct((groups, b_tile, npoint_pad), jnp.int32)
        out_specs = pl.BlockSpec((1, b_tile, npoint_pad), lambda g: (g, 0, 0))

    def build(single_buffer):
        if single_buffer:
            # Grid has 1-2 programs and the body runs npoint serial iterations;
            # double buffering the (1,d,b_tile,n) input buys nothing and can
            # blow VMEM (esp. 64 MiB v7x) -> single-buffer it.
            in_spec = pl.BlockSpec((1, d, b_tile, n), lambda g: (g, 0, 0, 0),
                                   pipeline_mode=pl.Buffered(1))
        else:
            in_spec = pl.BlockSpec((1, d, b_tile, n), lambda g: (g, 0, 0, 0))
        return pl.pallas_call(
            kernel,
            out_shape=out_shape,
            grid=(groups,),
            in_specs=[in_spec],
            out_specs=out_specs,
            scratch_shapes=[pltpu.VMEM((b_tile, n), jnp.float32),    # sq norms
                            pltpu.VMEM((b_tile, n), jnp.float32)],   # running min
            compiler_params=pltpu.CompilerParams(
                dimension_semantics=("parallel",),
                vmem_limit_bytes=_vmem_limit_bytes()),
        )(planes)

    try:
        out = build(single_buffer=True)
    except Exception:
        # pipeline_mode=pl.Buffered(1) unavailable: fall back to default spec.
        out = build(single_buffer=False)

    def unpack(o):
        return o.reshape(groups * b_tile, npoint_pad)[:b, :npoint]

    if with_dfps:
        return unpack(out[0]), unpack(out[1])
    return unpack(out)


def _dfps_sampler(points, features, npoint):
    return furthest_point_sample(points, npoint)


def _ffps_sampler(points, features, npoint):
    planes = _feature_planes(points, features)
    return _feature_fps_call(planes, npoint, with_dfps=False)


def _fs_sampler(points, features, npoint):
    planes = _feature_planes(points, features)
    idx_ffps, idx_dfps = _feature_fps_call(planes, npoint, with_dfps=True)
    return jnp.concatenate([idx_ffps, idx_dfps], axis=1)


def _get_sampler(sampler_type):
    if sampler_type == 'D-FPS':
        return _dfps_sampler
    elif sampler_type == 'F-FPS':
        return _ffps_sampler
    elif sampler_type == 'FS':
        return _fs_sampler
    raise ValueError(
        f'Only "sampler_type" of "D-FPS", "F-FPS", or "FS" are supported, '
        f'got {sampler_type}')


class PointsSampler:
    """JAX/Pallas port of mmdet3d Points_Sampler."""

    def __init__(self, num_point, fps_mod_list=('D-FPS',),
                 fps_sample_range_list=(-1,)):
        assert len(num_point) == len(fps_mod_list) == len(fps_sample_range_list)
        self.num_point = list(num_point)
        self.fps_sample_range_list = list(fps_sample_range_list)
        self.samplers = [_get_sampler(m) for m in fps_mod_list]

    def __call__(self, points_xyz, features):
        """points_xyz: (B, N, 3), features: (B, C, N) -> (B, total_npoint)."""
        # force_fp32
        points_xyz = points_xyz.astype(jnp.float32)
        features = features.astype(jnp.float32)
        indices = []
        last_fps_end_index = 0
        for fps_sample_range, sampler, npoint in zip(
                self.fps_sample_range_list, self.samplers, self.num_point):
            assert fps_sample_range < points_xyz.shape[1]
            if fps_sample_range == -1:
                sample_points_xyz = points_xyz[:, last_fps_end_index:]
                sample_features = features[:, :, last_fps_end_index:]
            else:
                sample_points_xyz = points_xyz[:, last_fps_end_index:fps_sample_range]
                sample_features = features[:, :, last_fps_end_index:fps_sample_range]
            fps_idx = sampler(sample_points_xyz, sample_features, npoint)
            indices.append(fps_idx + last_fps_end_index)
            # NOTE: mirrors the upstream mmdet3d accounting quirk for -1 ranges.
            last_fps_end_index += fps_sample_range
        return jnp.concatenate(indices, axis=1)


# ----------------------------------------------------------------------------
# Demo / smoke test
# ----------------------------------------------------------------------------
if __name__ == "__main__":
    key = jax.random.PRNGKey(0)
    k1, k2 = jax.random.split(key)
    B, N, C = 2, 256, 4
    points_xyz = jax.random.normal(k1, (B, N, 3), dtype=jnp.float32)
    features = jax.random.normal(k2, (B, C, N), dtype=jnp.float32)

    # Default config: fps_mod_list=['D-FPS'], fps_sample_range_list=[-1]
    sampler = PointsSampler(num_point=[32])
    idx = jax.block_until_ready(sampler(points_xyz, features))
    assert idx.shape == (B, 32) and idx.dtype == jnp.int32
    # Semantic sanity: first index is 0, all in range, and (distinct random
    # points) FPS never repeats an index within a row.
    assert bool(jnp.all(idx[:, 0] == 0))
    assert bool(jnp.all((idx >= 0) & (idx < N)))
    sorted_idx = jnp.sort(idx, axis=1)
    assert bool(jnp.all(sorted_idx[:, 1:] != sorted_idx[:, :-1]))

    # Multi-stage config exercising F-FPS and fused-FS kernels with a range.
    sampler2 = PointsSampler(num_point=[16, 8],
                             fps_mod_list=['F-FPS', 'FS'],
                             fps_sample_range_list=[128, -1])
    idx2 = jax.block_until_ready(sampler2(points_xyz, features))
    assert idx2.shape == (B, 16 + 2 * 8) and idx2.dtype == jnp.int32
    assert bool(jnp.all((idx2[:, :16] >= 0) & (idx2[:, :16] < 128)))
    assert bool(jnp.all((idx2[:, 16:] >= 128) & (idx2[:, 16:] < N)))

    print("KERNEL_OK")
</pallas_src>

<mosaic_0001>
module attributes {stable_mosaic.version = 11 : i64} {
  func.func @_dfps_kernel(%arg0: i32, %arg1: memref<1x3x2x256xf32, #tpu.memory_space<vmem>>, %arg2: memref<1x2x128xi32, #tpu.memory_space<vmem>>, %arg3: memref<2x256xf32, #tpu.memory_space<vmem>>) attributes {dimension_semantics = [#tpu.dimension_semantics<parallel>], iteration_bounds = array<i64: 1>, scalar_prefetch = 0 : i64, scratch_operands = 1 : i64, tpu.core_type = #tpu.core_type<tc>, window_params = [{transform_indices = @transform_0, window_bounds = array<i64: 1, 3, 2, 256>}, {transform_indices = @transform_1, window_bounds = array<i64: 1, 2, 128>}]} {
    %0 = tpu.iota {dimensions = array<i32: 1>} : vector<2x256xi32>
    %1 = tpu.iota {dimensions = array<i32: 1>} : vector<2x128xi32>
    %cst = arith.constant 1.000000e+10 : f32
    %2 = vector.broadcast %cst : f32 to vector<2x256xf32>
    %c0_i32 = arith.constant 0 : i32
    %3 = vector.broadcast %c0_i32 : i32 to vector<2x128xi32>
    %c0_i32_0 = arith.constant 0 : i32
    %4 = vector.broadcast %c0_i32_0 : i32 to vector<2x1xi32>
    %c1_i32 = arith.constant 1 : i32
    %c31_i32 = arith.constant 31 : i32
    %5 = arith.addi %c1_i32, %c31_i32 : i32
    %c1_i32_1 = arith.constant 1 : i32
    %6:3 = scf.for %arg4 = %c1_i32 to %5 step %c1_i32_1 iter_args(%arg5 = %3, %arg6 = %4, %arg7 = %2) -> (vector<2x128xi32>, vector<2x1xi32>, vector<2x256xf32>)  : i32 {
      %10 = vector.broadcast %arg6 : vector<2x1xi32> to vector<2x256xi32>
      %11 = arith.cmpi eq, %0, %10 : vector<2x256xi32>
      %12 = arith.extui %11 : vector<2x256xi1> to vector<2x256xi32>
      %13 = arith.sitofp %12 : vector<2x256xi32> to vector<2x256xf32>
      %cst_5 = arith.constant 0.000000e+00 : f32
      %14 = vector.broadcast %cst_5 : f32 to vector<2x256xf32>
      %c0_6 = arith.constant 0 : index
      %c0_7 = arith.constant 0 : index
      %c0_8 = arith.constant 0 : index
      %c0_9 = arith.constant 0 : index
      %15 = vector.load %arg1[%c0_6, %c0_7, %c0_8, %c0_9] : memref<1x3x2x256xf32, #tpu.memory_space<vmem>>, vector<1x1x2x256xf32>
      %16 = vector.shape_cast %15 : vector<1x1x2x256xf32> to vector<2x256xf32>
      %17 = arith.mulf %16, %13 : vector<2x256xf32>
      %cst_10 = arith.constant dense<0.000000e+00> : vector<2xf32>
      %18 = vector.multi_reduction <add>, %17, %cst_10 [1] : vector<2x256xf32> to vector<2xf32>
      %19 = vector.shape_cast %18 : vector<2xf32> to vector<2x1xf32>
      %20 = vector.broadcast %19 : vector<2x1xf32> to vector<2x256xf32>
      %21 = arith.subf %16, %20 : vector<2x256xf32>
      %22 = arith.mulf %21, %21 : vector<2x256xf32>
      %23 = arith.addf %14, %22 : vector<2x256xf32>
      %c0_11 = arith.constant 0 : index
      %c1 = arith.constant 1 : index
      %c0_12 = arith.constant 0 : index
      %c0_13 = arith.constant 0 : index
      %24 = vector.load %arg1[%c0_11, %c1, %c0_12, %c0_13] : memref<1x3x2x256xf32, #tpu.memory_space<vmem>>, vector<1x1x2x256xf32>
      %25 = vector.shape_cast %24 : vector<1x1x2x256xf32> to vector<2x256xf32>
      %26 = arith.mulf %25, %13 : vector<2x256xf32>
      %cst_14 = arith.constant dense<0.000000e+00> : vector<2xf32>
      %27 = vector.multi_reduction <add>, %26, %cst_14 [1] : vector<2x256xf32> to vector<2xf32>
      %28 = vector.shape_cast %27 : vector<2xf32> to vector<2x1xf32>
      %29 = vector.broadcast %28 : vector<2x1xf32> to vector<2x256xf32>
      %30 = arith.subf %25, %29 : vector<2x256xf32>
      %31 = arith.mulf %30, %30 : vector<2x256xf32>
      %32 = arith.addf %23, %31 : vector<2x256xf32>
      %c0_15 = arith.constant 0 : index
      %c2 = arith.constant 2 : index
      %c0_16 = arith.constant 0 : index
      %c0_17 = arith.constant 0 : index
      %33 = vector.load %arg1[%c0_15, %c2, %c0_16, %c0_17] : memref<1x3x2x256xf32, #tpu.memory_space<vmem>>, vector<1x1x2x256xf32>
      %34 = vector.shape_cast %33 : vector<1x1x2x256xf32> to vector<2x256xf32>
      %35 = arith.mulf %34, %13 : vector<2x256xf32>
      %cst_18 = arith.constant dense<0.000000e+00> : vector<2xf32>
      %36 = vector.multi_reduction <add>, %35, %cst_18 [1] : vector<2x256xf32> to vector<2xf32>
      %37 = vector.shape_cast %36 : vector<2xf32> to vector<2x1xf32>
      %38 = vector.broadcast %37 : vector<2x1xf32> to vector<2x256xf32>
      %39 = arith.subf %34, %38 : vector<2x256xf32>
      %40 = arith.mulf %39, %39 : vector<2x256xf32>
      %41 = arith.addf %32, %40 : vector<2x256xf32>
      %42 = arith.minimumf %arg7, %41 : vector<2x256xf32>
      %cst_19 = arith.constant dense<0xFF800000> : vector<2xf32>
      %43 = vector.multi_reduction <maximumf>, %42, %cst_19 [1] : vector<2x256xf32> to vector<2xf32>
      %44 = vector.shape_cast %43 : vector<2xf32> to vector<2x1xf32>
      %45 = vector.broadcast %44 : vector<2x1xf32> to vector<2x256xf32>
      %46 = arith.cmpf oge, %42, %45 : vector<2x256xf32>
      %c256_i32 = arith.constant 256 : i32
      %47 = vector.broadcast %c256_i32 : i32 to vector<2x256xi32>
      %48 = arith.select %46, %0, %47 : vector<2x256xi1>, vector<2x256xi32>
      %cst_20 = arith.constant dense<2147483647> : vector<2xi32>
      %49 = vector.multi_reduction <minsi>, %48, %cst_20 [1] : vector<2x256xi32> to vector<2xi32>
      %50 = vector.shape_cast %49 : vector<2xi32> to vector<2x1xi32>
      %c0_i32_21 = arith.constant 0 : i32
      %51 = arith.subi %arg4, %c0_i32_21 : i32
      %52 = vector.broadcast %51 : i32 to vector<2x128xi32>
      %53 = arith.cmpi eq, %1, %52 : vector<2x128xi32>
      %54 = vector.shape_cast %50 : vector<2x1xi32> to vector<2x1xi32>
      %55 = vector.broadcast %54 : vector<2x1xi32> to vector<2x128xi32>
      %56 = arith.select %53, %55, %arg5 : vector<2x128xi1>, vector<2x128xi32>
      scf.yield %56, %50, %42 : vector<2x128xi32>, vector<2x1xi32>, vector<2x256xf32>
    }
    %c31_i32_2 = arith.constant 31 : i32
    %c0 = arith.constant 0 : index
    %c0_3 = arith.constant 0 : index
    %c0_4 = arith.constant 0 : index
    %7 = vector.load %arg2[%c0, %c0_3, %c0_4] : memref<1x2x128xi32, #tpu.memory_space<vmem>>, vector<1x2x128xi32>
    %8 = vector.shape_cast %7 : vector<1x2x128xi32> to vector<2x128xi32>
    %9 = vector.shape_cast %6#0 : vector<2x128xi32> to vector<1x2x128xi32>
    tpu.vector_store %arg2[%c0, %c0_3, %c0_4], %9 {strides = array<i32>} : memref<1x2x128xi32, #tpu.memory_space<vmem>>, vector<1x2x128xi32>,
    return
  }
  func.func @transform_0(%arg0: i32) -> (i32, i32, i32, i32) {
    %c0_i32 = arith.constant 0 : i32
    %c0_i32_0 = arith.constant 0 : i32
    %c0_i32_1 = arith.constant 0 : i32
    %c0_i32_2 = arith.constant 0 : i32
    return %arg0, %c0_i32, %c0_i32_0, %c0_i32_1 : i32, i32, i32, i32
  }
  func.func @transform_1(%arg0: i32) -> (i32, i32, i32) {
    %c0_i32 = arith.constant 0 : i32
    %c0_i32_0 = arith.constant 0 : i32
    %c0_i32_1 = arith.constant 0 : i32
    return %arg0, %c0_i32, %c0_i32_0 : i32, i32, i32
  }
}

</mosaic_0001>

<llo_original>
// kernel: tpu_custom_call.1
$region0: #{tpu_custom_call.1}
  #allocation0 [shape = 'u32[]', space=smem, size = 0x4, offset = 0x4, fixed_abs, tag = 'smem constant byte address 0x4 - core index']
  #allocation1 [shape = 'u32[72,128]{1,0:T(1,128)}', space=vmem, size = 0x9000, scoped, tag = 'internal scratch']
  #allocation2 [shape = 'f32[2,256]{1,0:T(2,128)}', space=vmem, size = 0x800, scoped, tag = 'scratch operand']
  %s0 = inlined_call_operand.hbm [shape: f32[1,3,2,256], index: 0, kind: input, shape index: {}]
  %s1 = inlined_call_operand.hbm [shape: s32[1,2,128], index: 1, kind: output, shape index: {}]
  %s2 = sld [smem:[#allocation0]]
  $region25: #{tpu_custom_call.1} parent=0
    _
  %s4 = ssub.s32 1, %s2
  %s5 = scalar_select 0, %s4, %s2
  $region1: #{tpu_custom_call.1} parent=0
    #allocation3 [shape = 'u8[6144]{0}', space=vmem, size = 0x1800, scoped, tag = 'input window, operand 0, single buffered']
    #allocation4 [shape = 's32[1]{0}', space=sflag, size = 0x4, scoped, tag = 'scoped memory for tpu_custom_call.1']
    #allocation5 [shape = 's32[1]{0}', space=sflag, size = 0x4, scoped, tag = 'scoped memory for tpu_custom_call.1']
    #allocation6 [shape = 'u8[1024]{0}', space=vmem, size = 0x400, scoped, tag = 'output window, operand 0, single buffered']
    %6 = vsyncpa [#allocation4], 0
    %7 = vsyncpa [#allocation5], 0
    // Predicated region
    $region2: #{tpu_custom_call.1} parent=1 // pred_check
      _
    $region3: #{tpu_custom_call.1} parent=1 // pred_check_branch
      %9 = sbr.rel (0) target = $region5
    $region4: #{tpu_custom_call.1} parent=1 // pred_region
      %11 = vsyncadd [#allocation4], 0
      %s12 = sshll.u32 %s0, 4
      %s13 = int_to_ptr.hbm [resolvable:$true] %s12
      %s14 = sshll.u32 [#allocation3], 4
      %s15 = int_to_ptr.vmem [resolvable:$true] %s14
      %20 = dma.hbm_to_vmem [thread:$0]  %s13, 192, %s15, [#allocation4], 64, 64, 4
    $region5: #{tpu_custom_call.1} parent=1 // pred_fallthru
      _
    // Predicated region
    $region6: #{tpu_custom_call.1} parent=1 // pred_check
      _
    $region7: #{tpu_custom_call.1} parent=1 // pred_check_branch
      %22 = sbr.rel (0) target = $region9
    $region8: #{tpu_custom_call.1} parent=1 // pred_region
      %24 = dma.done [#allocation4], 192
    $region9: #{tpu_custom_call.1} parent=1 // pred_fallthru
      _
    %v25 = vlaneseq
    %v26 = vand.u32 %v25, 127
    %v27 = vadd.s32 %v26, 128
    loop: start=1, step=1, limit=32
    $region10: #{tpu_custom_call.1} parent=1 // loop_pre_header
      _
    $region11: #{tpu_custom_call.1} parent=1 // loop_header
      %s29 = sphi 1, %s33
      %p30 = scmp.ge.s32.totalorder %s29, 32
      %v34 = vphi 0, %v162
      %v35 = vphi 0, %v159
      %v36 = vphi 1e+10, %v117
    $region12: #{tpu_custom_call.1} parent=1 // loop_header_branch
      %32 = sbr.rel (%p30) target = $region16
    $region13: #{tpu_custom_call.1} parent=1 // loop_body
      %vm37 = vcmp.eq.s32.totalorder %v26, %v35
      %vm38 = vcmp.eq.s32.totalorder %v27, %v35
      %v39 = vsel %vm37, 1, 0
      %v40 = vsel %vm38, 1, 0
      %v41 = vcvt.s32.f32 %v39
      %v42 = vcvt.s32.f32 %v40
      %v43 = vld [vmem:[#allocation3] sm:$0xf]
      %v46 = vrot.slane %v42, 6
      %vm47 = vcmask 1041408
      %v48 = vsel %vm47, %v41, %v46
      %v50 = vmul.f32 %v43, %v48
      %52 = vst [vmem:[#allocation1] ss:$4 sm:$0xff] %v50
      %v53 = vld.sshfl [vmem:[#allocation1] sm:$0xff pattern:$0x73625140]
      %v54 = vld.sshfl [vmem:[#allocation1 + $0x8] sm:$0xff pattern:$0x73625140]
      %v57 = vsel %vm47, %v53, 0.0
      %v58 = vsel %vm47, %v54, 0.0
      %v59 = vadd.f32 %v57, %v58
      %60 = vadd.xlane.f32.xlu0 %v59
      %v61 = vpop.xlane.xlu0 %60
      %v64 = vunpack.c.l.s4 269488144
      %v65 = vunpack.c.0.s8 %v64
      %v66 = vperm.slane %v61, %v65
      %v68 = vsub.f32 %v43, %v66
      %v69 = vmul.f32 %v68, %v68
      %v70 = vadd.f32 %v69, 0.0
      %s71 = scalar_lea.vmem [#allocation3], 4
      %v72 = vld [vmem:[%s71] sm:$0xf]
      %v73 = vmul.f32 %v72, %v48
      %75 = vst [vmem:[#allocation1] ss:$4 sm:$0xff] %v73
      %v76 = vld.sshfl [vmem:[#allocation1] sm:$0xff pattern:$0x73625140]
      %v77 = vld.sshfl [vmem:[#allocation1 + $0x8] sm:$0xff pattern:$0x73625140]
      %v80 = vsel %vm47, %v76, 0.0
      %v81 = vsel %vm47, %v77, 0.0
      %v82 = vadd.f32 %v80, %v81
      %83 = vadd.xlane.f32.xlu0 %v82
      %v84 = vpop.xlane.xlu0 %83
      %v87 = vunpack.c.l.s4 269488144
      %v88 = vunpack.c.0.s8 %v87
      %v89 = vperm.slane %v84, %v88
      %v91 = vsub.f32 %v72, %v89
      %v92 = vmul.f32 %v91, %v91
      %v93 = vadd.f32 %v70, %v92
      %s94 = scalar_lea.vmem [#allocation3], 8
      %v95 = vld [vmem:[%s94] sm:$0xf]
      %v96 = vmul.f32 %v95, %v48
      %98 = vst [vmem:[#allocation1] ss:$4 sm:$0xff] %v96
      %v99 = vld.sshfl [vmem:[#allocation1] sm:$0xff pattern:$0x73625140]
      %v100 = vld.sshfl [vmem:[#allocation1 + $0x8] sm:$0xff pattern:$0x73625140]
      %v103 = vsel %vm47, %v99, 0.0
      %v104 = vsel %vm47, %v100, 0.0
      %v105 = vadd.f32 %v103, %v104
      %106 = vadd.xlane.f32.xlu0 %v105
      %v107 = vpop.xlane.xlu0 %106
      %v110 = vunpack.c.l.s4 269488144
      %v111 = vunpack.c.0.s8 %v110
      %v112 = vperm.slane %v107, %v111
      %v114 = vsub.f32 %v95, %v112
      %v115 = vmul.f32 %v114, %v114
      %v116 = vadd.f32 %v93, %v115
      %v117 = vmin.f32 %v36, %v116
      %119 = vst [vmem:[#allocation1] ss:$4 sm:$0xff] %v117
      %v120 = vld.sshfl [vmem:[#allocation1] sm:$0xff pattern:$0x73625140]
      %v121 = vld.sshfl [vmem:[#allocation1 + $0x8] sm:$0xff pattern:$0x73625140]
      %v124 = vsel %vm47, %v120, -inf
      %v125 = vsel %vm47, %v121, -inf
      %v126 = vmax.f32 %v124, %v125
      %127 = vmax.xlane.f32.xlu0 %v126
      %v128 = vpop.xlane.xlu0 %127
      %v131 = vunpack.c.l.s4 269488144
      %v132 = vunpack.c.0.s8 %v131
      %v133 = vperm.slane %v128, %v132
      %vm135 = vcmp.ge.f32.partialorder %v117, %v133
      %v136 = vrot.slane %v27, 6
      %v137 = vsel %vm47, %v26, %v136
      %v138 = vsel %vm135, %v137, 256
      %139 = vst [vmem:[#allocation1] ss:$4 sm:$0xff] %v138
      %v140 = vld.sshfl [vmem:[#allocation1] sm:$0xff pattern:$0x73625140]
      %v141 = vld.sshfl [vmem:[#allocation1 + $0x8] sm:$0xff pattern:$0x73625140]
      %v142 = vsel %vm47, %v140, 2147483647
      %v143 = vsel %vm47, %v141, 2147483647
      %vm144 = vcmp.lt.s32.totalorder %v142, %v143
      %v145 = vsel %vm144, %v142, %v143
      %v146 = vand.u32 %v145, 65535
      %v147 = vshra.s32 %v145, 16
      %v148 = vcvt.s32.f32 %v146
      %v149 = vcvt.s32.f32 %v147
      %150 = vmin.xlane.f32.xlu0 %v149
      %v151 = vpop.xlane.xlu0 %150
      %vm152 = vcmp.eq.f32.partialorder %v149, %v151
      %v153 = vsel %vm152, %v148, inf
      %154 = vmin.xlane.f32.xlu0 %v153
      %v155 = vpop.xlane.xlu0 %154
      %v156 = vcvt.f32.s32 %v155
      %v157 = vcvt.f32.s32 %v151
      %v158 = vshll.u32 %v157, 16
      %v159 = vadd.s32 %v158, %v156
      %v160 = vstv %s29
      %vm161 = vcmp.eq.s32.totalorder %v26, %v160
      %v162 = vsel %vm161, %v159, %v34
    $region14: #{tpu_custom_call.1} parent=1 // loop_footer
      %s33 = sadd.s32 1, %s29
    $region15: #{tpu_custom_call.1} parent=1 // loop_footer_branch
      %28 = sbr.rel target = $region11
    $region16: #{tpu_custom_call.1} parent=1 // loop_exit
      _
    %163 = vst [vmem:[#allocation6] sm:$0x3] %v34
    // Predicated region
    $region17: #{tpu_custom_call.1} parent=1 // pred_check
      _
    $region18: #{tpu_custom_call.1} parent=1 // pred_check_branch
      %165 = sbr.rel (0) target = $region20
    $region19: #{tpu_custom_call.1} parent=1 // pred_region
      %167 = vsyncadd [#allocation5], 0
      %s169 = sshll.u32 [#allocation6], 4
      %s170 = int_to_ptr.vmem [resolvable:$true] %s169
      %s171 = sshll.u32 %s1, 4
      %s172 = int_to_ptr.hbm [resolvable:$true] %s171
      %174 = dma.vmem_to_hbm [thread:$0]  %s170, 32, %s172, [#allocation5]
    $region20: #{tpu_custom_call.1} parent=1 // pred_fallthru
      _
    // Predicated region
    $region21: #{tpu_custom_call.1} parent=1 // pred_check
      _
    $region22: #{tpu_custom_call.1} parent=1 // pred_check_branch
      %176 = sbr.rel (0) target = $region24
    $region23: #{tpu_custom_call.1} parent=1 // pred_region
      %178 = dma.done [#allocation5], 32
    $region24: #{tpu_custom_call.1} parent=1 // pred_fallthru
      _
    %179 = vsyncpa [#allocation4], 1
    %180 = vsyncpa [#allocation5], 1

</llo_original>
